<compile_context>
chip_gen: v6e
topology: v6e:2x2x1
jax: 0.10.0
libtpu: 0.0.40
codegen_flags: <defaults>
</compile_context>

<pallas_src>
import functools

import jax
import jax.numpy as jnp
from jax.experimental import pallas as pl
from jax.experimental.pallas import tpu as pltpu

SMOOTHING = 0.1


def _label_smoothing_kernel(preds_ref, target_ref, partial_ref, *, n_rows, smoothing):
    """One grid step = one row-tile of preds; emits that tile's partial loss sum."""
    i = pl.program_id(0)
    row_tile, c = preds_ref.shape

    logits = preds_ref[...].astype(jnp.float32)                          # (TN, C)
    m = jnp.max(logits, axis=-1, keepdims=True)                          # (TN, 1)
    shifted = logits - m                                                 # (TN, C), <= 0
    lse = jnp.log(jnp.sum(jnp.exp(shifted), axis=-1, keepdims=True))     # (TN, 1)
    sum_shifted = jnp.sum(shifted, axis=-1, keepdims=True)               # (TN, 1)

    # target log-prob numerator via one-hot compare (no dynamic gather on TPU)
    col_ids = jax.lax.broadcasted_iota(jnp.int32, shifted.shape, 1)      # (TN, C)
    tgt = target_ref[...]                                                # (TN, 1) int32
    tgt_shifted = jnp.sum(jnp.where(col_ids == tgt, shifted, 0.0),
                          axis=-1, keepdims=True)                        # (TN, 1)

    # s/C * (C*lse - sum_shifted) + (1-s) * (lse - shifted[t])
    #   == lse - (s/C)*sum_shifted - (1-s)*shifted[t]
    per_row = (lse
               - (smoothing / c) * sum_shifted
               - (1.0 - smoothing) * tgt_shifted)                        # (TN, 1)

    # mask rows past the true N (last, possibly partial, tile)
    row_ids = i * row_tile + jax.lax.broadcasted_iota(jnp.int32, (row_tile, 1), 0)
    per_row = jnp.where(row_ids < n_rows, per_row, 0.0)

    partial_ref[...] = jnp.sum(per_row, axis=0, keepdims=True)           # (1, 1)


def label_smoothing_loss(preds, target, *, smoothing=SMOOTHING, row_tile=512):
    """preds: (N, C) float, target: (N,) int -> scalar f32 loss."""
    n, c = preds.shape
    itemsize = jnp.dtype(preds.dtype).itemsize

    # Cap the tile so the double-buffered preds block stays <= ~48 MiB
    # (safe on v7x's 64 MiB VMEM; plenty of headroom on v5e/v6e's 128 MiB).
    max_rows = max(8, ((48 << 20) // max(1, 2 * c * itemsize)) // 8 * 8)
    row_tile = min(int(row_tile), max_rows)
    n_pad8 = ((n + 7) // 8) * 8
    row_tile = min(((row_tile + 7) // 8) * 8, n_pad8)

    num_tiles = pl.cdiv(n, row_tile)
    target2d = target.astype(jnp.int32).reshape(n, 1)

    # double-buffered inputs + slack for output/temps
    vmem_bytes = 2 * (row_tile * c * itemsize + row_tile * 4) + (2 << 20)
    vmem_bytes = int(min(max(vmem_bytes, 4 << 20), 100 << 20))

    kernel = functools.partial(
        _label_smoothing_kernel, n_rows=n, smoothing=float(smoothing))

    partials = pl.pallas_call(
        kernel,
        out_shape=jax.ShapeDtypeStruct((num_tiles, 1), jnp.float32),
        grid_spec=pltpu.PrefetchScalarGridSpec(
            num_scalar_prefetch=0,
            grid=(num_tiles,),
            in_specs=[
                pl.BlockSpec((row_tile, c), lambda i: (i, 0)),
                pl.BlockSpec((row_tile, 1), lambda i: (i, 0)),
            ],
            out_specs=pl.BlockSpec((1, 1), lambda i: (i, 0)),
        ),
        compiler_params=pltpu.CompilerParams(
            dimension_semantics=("parallel",),
            vmem_limit_bytes=vmem_bytes,
        ),
    )(preds, target2d)

    return jnp.sum(partials) / jnp.float32(n)


def _reference(preds, target, smoothing=SMOOTHING):
    logp = jax.nn.log_softmax(preds.astype(jnp.float32), axis=-1)
    n_cls = preds.shape[-1]
    loss = jnp.mean(-jnp.sum(logp, axis=-1))
    nll = jnp.mean(-jnp.take_along_axis(logp, target[:, None], axis=-1)[:, 0])
    return smoothing * (loss / n_cls) + (1.0 - smoothing) * nll


if __name__ == "__main__":
    key = jax.random.PRNGKey(0)
    k1, k2 = jax.random.split(key)
    N, C = 16, 32
    preds = jax.random.normal(k1, (N, C), dtype=jnp.float32)
    target = jax.random.randint(k2, (N,), 0, C, dtype=jnp.int32)

    out = label_smoothing_loss(preds, target)
    jax.block_until_ready(out)

    ref = _reference(preds, target)
    assert jnp.allclose(out, ref, atol=1e-5, rtol=1e-5), (out, ref)
    print("KERNEL_OK")
</pallas_src>

<mosaic_0001>
module attributes {stable_mosaic.version = 11 : i64} {
  func.func @_label_smoothing_kernel(%arg0: i32, %arg1: memref<16x32xf32, #tpu.memory_space<vmem>>, %arg2: memref<16x1xi32, #tpu.memory_space<vmem>>, %arg3: memref<1x1xf32, #tpu.memory_space<vmem>>) attributes {dimension_semantics = [#tpu.dimension_semantics<parallel>], iteration_bounds = array<i64: 1>, scalar_prefetch = 0 : i64, scratch_operands = 0 : i64, tpu.core_type = #tpu.core_type<tc>, window_params = [{transform_indices = @transform_0, window_bounds = array<i64: 16, 32>}, {transform_indices = @transform_1, window_bounds = array<i64: 16, 1>}, {transform_indices = @transform_2, window_bounds = array<i64: 1, 1>}]} {
    %c0 = arith.constant 0 : index
    %c0_0 = arith.constant 0 : index
    %0 = vector.load %arg1[%c0, %c0_0] : memref<16x32xf32, #tpu.memory_space<vmem>>, vector<16x32xf32>
    %cst = arith.constant dense<0xFF800000> : vector<16xf32>
    %1 = vector.multi_reduction <maximumf>, %0, %cst [1] : vector<16x32xf32> to vector<16xf32>
    %2 = vector.shape_cast %1 : vector<16xf32> to vector<16x1xf32>
    %3 = vector.broadcast %2 : vector<16x1xf32> to vector<16x32xf32>
    %4 = arith.subf %0, %3 : vector<16x32xf32>
    %5 = math.exp %4 : vector<16x32xf32>
    %cst_1 = arith.constant dense<0.000000e+00> : vector<16xf32>
    %6 = vector.multi_reduction <add>, %5, %cst_1 [1] : vector<16x32xf32> to vector<16xf32>
    %7 = vector.shape_cast %6 : vector<16xf32> to vector<16x1xf32>
    %8 = math.log %7 : vector<16x1xf32>
    %cst_2 = arith.constant dense<0.000000e+00> : vector<16xf32>
    %9 = vector.multi_reduction <add>, %4, %cst_2 [1] : vector<16x32xf32> to vector<16xf32>
    %10 = vector.shape_cast %9 : vector<16xf32> to vector<16x1xf32>
    %11 = tpu.iota {dimensions = array<i32: 1>} : vector<16x32xi32>
    %c0_3 = arith.constant 0 : index
    %c0_4 = arith.constant 0 : index
    %12 = vector.load %arg2[%c0_3, %c0_4] : memref<16x1xi32, #tpu.memory_space<vmem>>, vector<16x1xi32>
    %13 = vector.broadcast %12 : vector<16x1xi32> to vector<16x32xi32>
    %14 = arith.cmpi eq, %11, %13 : vector<16x32xi32>
    %cst_5 = arith.constant 0.000000e+00 : f32
    %15 = vector.broadcast %cst_5 : f32 to vector<16x32xf32>
    %16 = arith.select %14, %4, %15 : vector<16x32xi1>, vector<16x32xf32>
    %cst_6 = arith.constant dense<0.000000e+00> : vector<16xf32>
    %17 = vector.multi_reduction <add>, %16, %cst_6 [1] : vector<16x32xf32> to vector<16xf32>
    %18 = vector.shape_cast %17 : vector<16xf32> to vector<16x1xf32>
    %cst_7 = arith.constant 3.125000e-03 : f32
    %19 = vector.broadcast %cst_7 : f32 to vector<16x1xf32>
    %20 = arith.mulf %19, %10 : vector<16x1xf32>
    %21 = arith.subf %8, %20 : vector<16x1xf32>
    %cst_8 = arith.constant 0.899999976 : f32
    %22 = vector.broadcast %cst_8 : f32 to vector<16x1xf32>
    %23 = arith.mulf %22, %18 : vector<16x1xf32>
    %24 = arith.subf %21, %23 : vector<16x1xf32>
    %c16_i32 = arith.constant 16 : i32
    %25 = arith.muli %arg0, %c16_i32 : i32
    %26 = tpu.iota {dimensions = array<i32: 0>} : vector<16x1xi32>
    %27 = vector.broadcast %25 : i32 to vector<16x1xi32>
    %28 = arith.addi %27, %26 : vector<16x1xi32>
    %c16_i32_9 = arith.constant 16 : i32
    %29 = vector.broadcast %c16_i32_9 : i32 to vector<16x1xi32>
    %30 = arith.cmpi slt, %28, %29 : vector<16x1xi32>
    %cst_10 = arith.constant 0.000000e+00 : f32
    %31 = vector.broadcast %cst_10 : f32 to vector<16x1xf32>
    %32 = arith.select %30, %24, %31 : vector<16x1xi1>, vector<16x1xf32>
    %cst_11 = arith.constant dense<0.000000e+00> : vector<1xf32>
    %33 = vector.multi_reduction <add>, %32, %cst_11 [0] : vector<16x1xf32> to vector<1xf32>
    %34 = vector.shape_cast %33 : vector<1xf32> to vector<1x1xf32>
    %c0_12 = arith.constant 0 : index
    %c0_13 = arith.constant 0 : index
    %35 = vector.load %arg3[%c0_12, %c0_13] : memref<1x1xf32, #tpu.memory_space<vmem>>, vector<1x1xf32>
    tpu.vector_store %arg3[%c0_12, %c0_13], %34 {strides = array<i32>} : memref<1x1xf32, #tpu.memory_space<vmem>>, vector<1x1xf32>,
    return
  }
  func.func @transform_0(%arg0: i32) -> (i32, i32) {
    %c0_i32 = arith.constant 0 : i32
    %c0_i32_0 = arith.constant 0 : i32
    return %arg0, %c0_i32 : i32, i32
  }
  func.func @transform_1(%arg0: i32) -> (i32, i32) {
    %c0_i32 = arith.constant 0 : i32
    %c0_i32_0 = arith.constant 0 : i32
    return %arg0, %c0_i32 : i32, i32
  }
  func.func @transform_2(%arg0: i32) -> (i32, i32) {
    %c0_i32 = arith.constant 0 : i32
    %c0_i32_0 = arith.constant 0 : i32
    return %arg0, %c0_i32 : i32, i32
  }
}

</mosaic_0001>

<llo_original>
// kernel: tpu_custom_call.1
$region0: #{tpu_custom_call.1}
  #allocation0 [shape = 'u32[]', space=smem, size = 0x4, offset = 0x4, fixed_abs, tag = 'smem constant byte address 0x4 - core index']
  #allocation1 [shape = 'u32[144,128]{1,0:T(1,128)}', space=vmem, size = 0x12000, scoped, tag = 'internal scratch']
  %s0 = inlined_call_operand.vmem [shape: f32[16,32], index: 0, kind: input, shape index: {}]
  %s1 = inlined_call_operand.vmem [shape: s32[16,1], index: 1, kind: input, shape index: {}]
  %s2 = inlined_call_operand.hbm [shape: f32[1,1], index: 2, kind: output, shape index: {}]
  %s3 = sld [smem:[#allocation0]]
  $region18: #{tpu_custom_call.1} parent=0
    _
  %s5 = ssub.s32 1, %s3
  %s6 = scalar_select 0, %s5, %s3
  $region1: #{tpu_custom_call.1} parent=0
    #allocation2 [shape = 'u8[512]{0}', space=vmem, size = 0x400, scoped, tag = 'output window, operand 0, single buffered']
    #allocation3 [shape = 's32[1]{0}', space=sflag, size = 0x4, scoped, tag = 'scoped memory for tpu_custom_call.1']
    %7 = vsyncpa [#allocation3], 0
    // Predicated region
    $region2: #{tpu_custom_call.1} parent=1 // pred_check
      _
    $region3: #{tpu_custom_call.1} parent=1 // pred_check_branch
      %9 = sbr.rel (0) target = $region5
    $region4: #{tpu_custom_call.1} parent=1 // pred_region
      _
    $region5: #{tpu_custom_call.1} parent=1 // pred_fallthru
      _
    // Predicated region
    $region6: #{tpu_custom_call.1} parent=1 // pred_check
      _
    $region7: #{tpu_custom_call.1} parent=1 // pred_check_branch
      %11 = sbr.rel (0) target = $region9
    $region8: #{tpu_custom_call.1} parent=1 // pred_region
      _
    $region9: #{tpu_custom_call.1} parent=1 // pred_fallthru
      _
    %v12 = vld [vmem:[%s0] sm:$0xff]
    %v13 = vld [vmem:[%s0 + $0x8] sm:$0xff]
    %vm14 = vcmask 261120
    %v15 = vsel %vm14, %v12, -inf
    %16 = vmax.xlane.f32.xlu0 %v15
    %v17 = vpop.xlane.xlu0 %16
    %v18 = vsel %vm14, %v13, -inf
    %19 = vmax.xlane.f32.xlu0 %v18
    %v20 = vpop.xlane.xlu0 %19
    %v21 = vsub.f32 %v12, %v17
    %v22 = vsub.f32 %v13, %v20
    %v23 = vmul.f32 %v21, 1.442695
    %v24 = vpow.pop %v23
    %v25 = vmul.f32 %v22, 1.442695
    %v26 = vpow.pop %v25
    %v27 = vsel %vm14, %v24, 0.0
    %28 = vadd.xlane.f32.xlu0 %v27
    %v29 = vpop.xlane.xlu0 %28
    %v30 = vsel %vm14, %v26, 0.0
    %31 = vadd.xlane.f32.xlu0 %v30
    %v32 = vpop.xlane.xlu0 %31
    %v33 = vlog2.pop %v29
    %v34 = vmul.f32 %v33, 0.6931472
    %v35 = vlog2.pop %v32
    %v36 = vmul.f32 %v35, 0.6931472
    %v37 = vsel %vm14, %v21, 0.0
    %38 = vadd.xlane.f32.xlu0 %v37
    %v39 = vpop.xlane.xlu0 %38
    %v40 = vsel %vm14, %v22, 0.0
    %41 = vadd.xlane.f32.xlu0 %v40
    %v42 = vpop.xlane.xlu0 %41
    %v43 = vlaneseq
    %v44 = vand.u32 %v43, 127
    %v45 = vld [vmem:[%s1] sm:$0xff]
    %v46 = vld [vmem:[%s1 + $0x8] sm:$0xff]
    %47 = vset.pattern.permute.xlu0 0
    %48 = vperm.xlu0 %47, %v45
    %v49 = vpop.permute.xlu0 %48
    %50 = vset.pattern.permute.xlu0 0
    %51 = vperm.xlu0 %50, %v46
    %v52 = vpop.permute.xlu0 %51
    %vm53 = vcmp.eq.s32.totalorder %v44, %v49
    %vm54 = vcmp.eq.s32.totalorder %v44, %v52
    %v55 = vsel %vm53, %v21, 0.0
    %v56 = vsel %vm54, %v22, 0.0
    %v57 = vsel %vm14, %v55, 0.0
    %58 = vadd.xlane.f32.xlu0 %v57
    %v59 = vpop.xlane.xlu0 %58
    %v60 = vsel %vm14, %v56, 0.0
    %61 = vadd.xlane.f32.xlu0 %v60
    %v62 = vpop.xlane.xlu0 %61
    %v63 = vmul.f32 %v39, 0.003125
    %v64 = vmul.f32 %v42, 0.003125
    %v65 = vsub.f32 %v34, %v63
    %v66 = vsub.f32 %v36, %v64
    %v67 = vmul.f32 %v59, 0.9
    %v68 = vmul.f32 %v62, 0.9
    %v69 = vsub.f32 %v65, %v67
    %v70 = vsub.f32 %v66, %v68
    %s71 = smul.u32 0, 16
    %v72 = vlaneseq
    %v73 = vshrl.u32 %v72, 7
    %v74 = vadd.s32 %v73, 8
    %v75 = vstv %s71
    %v76 = vadd.s32 %v75, %v73
    %v77 = vadd.s32 %v75, %v74
    %vm78 = vcmp.lt.s32.totalorder %v76, 16
    %vm79 = vcmp.lt.s32.totalorder %v77, 16
    %v80 = vsel %vm78, %v69, 0.0
    %v81 = vsel %vm79, %v70, 0.0
    %v82 = vadd.f32 %v80, %v81
    %v83 = vrot.slane %v82, 4
    %v84 = vadd.f32 %v82, %v83
    %v85 = vrot.slane %v84, 2
    %v86 = vadd.f32 %v84, %v85
    %v87 = vrot.slane %v86, 1
    %v88 = vadd.f32 %v86, %v87
    %vm89 = vcmask 0
    %90 = vst.msk [vmem:[#allocation2] sm:$0x1] %vm89, %v88
    // Predicated region
    $region10: #{tpu_custom_call.1} parent=1 // pred_check
      _
    $region11: #{tpu_custom_call.1} parent=1 // pred_check_branch
      %92 = sbr.rel (0) target = $region13
    $region12: #{tpu_custom_call.1} parent=1 // pred_region
      %s94 = ssub.s32 16, 16
      %95 = vsyncadd [#allocation3], %s94
      %s97 = sshll.u32 [#allocation2], 4
      %s98 = int_to_ptr.vmem [resolvable:$true] %s97
      %100 = dma.vmem_to_hbm [thread:$0]  %s98, 16, %s2, [#allocation3]
    $region13: #{tpu_custom_call.1} parent=1 // pred_fallthru
      _
    // Predicated region
    $region14: #{tpu_custom_call.1} parent=1 // pred_check
      _
    $region15: #{tpu_custom_call.1} parent=1 // pred_check_branch
      %102 = sbr.rel (0) target = $region17
    $region16: #{tpu_custom_call.1} parent=1 // pred_region
      %103 = dma.done [#allocation3], 16
    $region17: #{tpu_custom_call.1} parent=1 // pred_fallthru
      _
    %104 = vsyncpa [#allocation3], 1

</llo_original>
